<compile_context>
chip_gen: v5e
topology: v5e:2x2
jax: 0.10.0
libtpu: 0.0.40
codegen_flags: <defaults>
</compile_context>

<pallas_src>
import jax
import jax.numpy as jnp
from jax import lax
from jax.experimental import pallas as pl
from jax.experimental.pallas import tpu as pltpu


# --------------------------------------------------------------------------
# Kernel A: row L2-normalization (F.normalize(x, dim=1, p=2)) + one-time cast
# --------------------------------------------------------------------------
def _normalize_kernel(x_ref, z_ref):
    x = x_ref[...].astype(jnp.float32)                        # (TM, D)
    ss = jnp.sum(x * x, axis=1, keepdims=True)                # (TM, 1)
    z = x * lax.rsqrt(jnp.maximum(ss, 1e-24))                 # == x / max(||x||, 1e-12)
    z_ref[...] = z.astype(z_ref.dtype)                        # cast to MXU dtype once


# --------------------------------------------------------------------------
# Kernel B: NT-Xent loss, row tiles x streamed key-column tiles
# --------------------------------------------------------------------------
def _make_loss_kernel(n_total: int, batch: int, inv_t: float, tm: int, tn: int):
    inv_t = float(inv_t)

    def kernel(q_ref, kc_ref, out_ref, m_sc, d_sc, pos_sc):
        i = pl.program_id(0)          # row-tile index   ("parallel")
        k = pl.program_id(1)          # column-tile index ("arbitrary", reduction)

        @pl.when(k == 0)
        def _():
            m_sc[...] = jnp.full_like(m_sc, -jnp.inf)
            d_sc[...] = jnp.zeros_like(d_sc)
            pos_sc[...] = jnp.zeros_like(pos_sc)

        # (TM, TN) similarity tile: contraction on D, f32 accumulation.
        sim = lax.dot_general(
            q_ref[...], kc_ref[...],
            dimension_numbers=(((1,), (1,)), ((), ())),
            preferred_element_type=jnp.float32,
        )

        rows = i * tm + lax.broadcasted_iota(jnp.int32, (tm, tn), 0)
        cols = k * tn + lax.broadcasted_iota(jnp.int32, (tm, tn), 1)

        # Positive partner column (r + B) mod N -- extracted from the same MXU
        # sim matrix, exactly like torch.diag(sim, +/-B) in the reference.
        shifted = rows + batch
        pos_col = jnp.where(shifted >= n_total, shifted - n_total, shifted)
        pos_sc[...] += jnp.sum(
            jnp.where(cols == pos_col, sim, 0.0), axis=1, keepdims=True)

        # Negatives-mask (~eye): exclude only the self term.
        sim_neg = jnp.where(cols == rows, -jnp.inf, sim)

        # Online (flash-softmax) denominator accumulation for robustness at
        # small temperatures.
        m_prev = m_sc[...]
        m_new = jnp.maximum(m_prev, jnp.max(sim_neg, axis=1, keepdims=True))
        alpha = jnp.exp((m_prev - m_new) * inv_t)
        p = jnp.exp((sim_neg - m_new) * inv_t)
        d_sc[...] = alpha * d_sc[...] + jnp.sum(p, axis=1, keepdims=True)
        m_sc[...] = m_new

        @pl.when(k == pl.num_programs(1) - 1)
        def _():
            # loss_row = log(sum_{j!=i} exp(sim_ij/t)) - pos_i/t
            #          = log(d) + m/t - pos/t
            loss_rows = jnp.log(d_sc[...]) + (m_sc[...] - pos_sc[...]) * inv_t
            tile_sum = jnp.sum(loss_rows)
            out_ref[...] = jnp.broadcast_to(tile_sum, out_ref.shape).astype(out_ref.dtype)

    return kernel


# --------------------------------------------------------------------------
# Wrapper
# --------------------------------------------------------------------------
def _pick_tile(n: int, preferred: int) -> int:
    for cand in (preferred, 1024, 512, 256, 128, 64, 32, 16, 8):
        if cand <= preferred and cand <= n and n % cand == 0:
            return cand
    return n  # fall back to the full extent (valid block shape)


def infonce_loss(feat1, feat2, temperature=0.5, *, block_rows=256, block_cols=512,
                 use_bf16=True):
    """feat1, feat2: (B, D) float arrays. Returns scalar NT-Xent loss (float32)."""
    B, D0 = feat1.shape
    assert feat2.shape == (B, D0)
    N = 2 * B
    feats = jnp.concatenate([feat1, feat2], axis=0).astype(jnp.float32)   # (N, D0)

    # Zero-pad embedding dim to a multiple of 128 lanes (norms/dots unchanged).
    D = max(128, ((D0 + 127) // 128) * 128)
    if D != D0:
        feats = jnp.pad(feats, ((0, 0), (0, D - D0)))

    mxu_dtype = jnp.bfloat16 if use_bf16 else jnp.float32

    tm = _pick_tile(N, block_rows)
    tn = _pick_tile(N, block_cols)
    gm, gn = N // tm, N // tn

    # --- Kernel A: normalize rows, emit MXU-dtype z ------------------------
    z = pl.pallas_call(
        _normalize_kernel,
        out_shape=jax.ShapeDtypeStruct((N, D), mxu_dtype),
        grid_spec=pl.GridSpec(
            grid=(gm,),
            in_specs=[pl.BlockSpec((tm, D), lambda i: (i, 0))],
            out_specs=pl.BlockSpec((tm, D), lambda i: (i, 0)),
        ),
        compiler_params=pltpu.CompilerParams(dimension_semantics=("parallel",)),
    )(feats)

    # --- Kernel B: streamed-K NT-Xent loss ---------------------------------
    partial = pl.pallas_call(
        _make_loss_kernel(N, B, 1.0 / float(temperature), tm, tn),
        out_shape=jax.ShapeDtypeStruct((gm, 8, 128), jnp.float32),
        grid_spec=pltpu.PrefetchScalarGridSpec(
            num_scalar_prefetch=0,
            grid=(gm, gn),
            in_specs=[
                pl.BlockSpec((tm, D), lambda i, k: (i, 0)),   # query row tile (constant in k)
                pl.BlockSpec((tn, D), lambda i, k: (k, 0)),   # streamed key-column tile
            ],
            out_specs=pl.BlockSpec((1, 8, 128), lambda i, k: (i, 0, 0)),
            scratch_shapes=[
                pltpu.VMEM((tm, 1), jnp.float32),   # running row max
                pltpu.VMEM((tm, 1), jnp.float32),   # running denominator
                pltpu.VMEM((tm, 1), jnp.float32),   # positive sims
            ],
        ),
        compiler_params=pltpu.CompilerParams(
            dimension_semantics=("parallel", "arbitrary"),
            vmem_limit_bytes=48 * 1024 * 1024,   # small working set; safe on v5e/v6e/v7x
        ),
    )(z, z)

    return jnp.sum(partial[:, 0, 0]) / N


# --------------------------------------------------------------------------
# Pure-JAX mirror of the PyTorch forward, for verification
# --------------------------------------------------------------------------
def _reference_loss(feat1, feat2, temperature=0.5):
    B = feat1.shape[0]
    N = 2 * B
    feats = jnp.concatenate([feat1, feat2], axis=0).astype(jnp.float32)
    z = feats / jnp.maximum(jnp.linalg.norm(feats, axis=1, keepdims=True), 1e-12)
    sim = jnp.dot(z, z.T, precision=lax.Precision.HIGHEST)
    positives = jnp.concatenate(
        [jnp.diagonal(sim, B), jnp.diagonal(sim, -B)], axis=0)
    nominator = jnp.exp(positives / temperature)
    mask = 1.0 - jnp.eye(N, dtype=jnp.float32)
    denominator = jnp.sum(mask * jnp.exp(sim / temperature), axis=1)
    return jnp.sum(-jnp.log(nominator / denominator)) / N


if __name__ == "__main__":
    key = jax.random.PRNGKey(0)
    k1, k2 = jax.random.split(key)

    batch_size, dim = 4, 32
    feat1 = jax.random.normal(k1, (batch_size, dim), dtype=jnp.float32)
    feat2 = jax.random.normal(k2, (batch_size, dim), dtype=jnp.float32)

    ref = jax.block_until_ready(_reference_loss(feat1, feat2, temperature=0.5))

    # Exact-precision path (f32 MXU operands): tight check vs reference.
    loss_f32 = jax.block_until_ready(
        infonce_loss(feat1, feat2, temperature=0.5, use_bf16=False))
    assert jnp.allclose(loss_f32, ref, rtol=2e-4, atol=2e-4), (loss_f32, ref)

    # Default fast path (bf16 MXU operands, f32 accumulation & element-wise).
    loss_bf16 = jax.block_until_ready(infonce_loss(feat1, feat2, temperature=0.5))
    assert jnp.allclose(loss_bf16, ref, rtol=5e-2, atol=5e-2), (loss_bf16, ref)

    print("KERNEL_OK")
</pallas_src>

<mosaic_0001>
module attributes {stable_mosaic.version = 11 : i64} {
  func.func @_normalize_kernel(%arg0: i32, %arg1: memref<8x128xf32, #tpu.memory_space<vmem>>, %arg2: memref<8x128xf32, #tpu.memory_space<vmem>>) attributes {dimension_semantics = [#tpu.dimension_semantics<parallel>], iteration_bounds = array<i64: 1>, scalar_prefetch = 0 : i64, scratch_operands = 0 : i64, tpu.core_type = #tpu.core_type<tc>, window_params = [{transform_indices = @transform_0, window_bounds = array<i64: 8, 128>}, {transform_indices = @transform_1, window_bounds = array<i64: 8, 128>}]} {
    %c0 = arith.constant 0 : index
    %c0_0 = arith.constant 0 : index
    %0 = vector.load %arg1[%c0, %c0_0] : memref<8x128xf32, #tpu.memory_space<vmem>>, vector<8x128xf32>
    %1 = arith.mulf %0, %0 : vector<8x128xf32>
    %cst = arith.constant dense<0.000000e+00> : vector<8xf32>
    %2 = vector.multi_reduction <add>, %1, %cst [1] : vector<8x128xf32> to vector<8xf32>
    %3 = vector.shape_cast %2 : vector<8xf32> to vector<8x1xf32>
    %cst_1 = arith.constant 1.000000e-24 : f32
    %4 = vector.broadcast %cst_1 : f32 to vector<8x1xf32>
    %5 = arith.maximumf %3, %4 : vector<8x1xf32>
    %6 = math.rsqrt %5 : vector<8x1xf32>
    %7 = vector.broadcast %6 : vector<8x1xf32> to vector<8x128xf32>
    %8 = arith.mulf %0, %7 : vector<8x128xf32>
    %c0_2 = arith.constant 0 : index
    %c0_3 = arith.constant 0 : index
    %9 = vector.load %arg2[%c0_2, %c0_3] : memref<8x128xf32, #tpu.memory_space<vmem>>, vector<8x128xf32>
    tpu.vector_store %arg2[%c0_2, %c0_3], %8 {strides = array<i32>} : memref<8x128xf32, #tpu.memory_space<vmem>>, vector<8x128xf32>,
    return
  }
  func.func @transform_0(%arg0: i32) -> (i32, i32) {
    %c0_i32 = arith.constant 0 : i32
    %c0_i32_0 = arith.constant 0 : i32
    return %arg0, %c0_i32 : i32, i32
  }
  func.func @transform_1(%arg0: i32) -> (i32, i32) {
    %c0_i32 = arith.constant 0 : i32
    %c0_i32_0 = arith.constant 0 : i32
    return %arg0, %c0_i32 : i32, i32
  }
}

</mosaic_0001>

<llo_original>
// kernel: tpu_custom_call.1
$region0: #{tpu_custom_call.1}
  #allocation0 [shape = 'u32[]', space=smem, size = 0x4, offset = 0x4, fixed_abs, tag = 'smem constant byte address 0x4 - core index']
  #allocation1 [shape = 'u32[72,128]{1,0:T(1,128)}', space=vmem, size = 0x9000, scoped, tag = 'internal scratch']
  %s0 = inlined_call_operand.hbm [shape: f32[8,128], index: 0, kind: input, shape index: {}]
  %s1 = inlined_call_operand.hbm [shape: f32[8,128], index: 1, kind: output, shape index: {}]
  %s2 = sld [smem:[#allocation0]]
  $region18: #{tpu_custom_call.1} parent=0
    _
  %s4 = ssub.s32 1, %s2
  %s5 = scalar_select 0, %s4, %s2
  $region1: #{tpu_custom_call.1} parent=0
    #allocation2 [shape = 'u8[4096]{0}', space=vmem, size = 0x1000, scoped, tag = 'input window, operand 0, single buffered']
    #allocation3 [shape = 's32[1]{0}', space=sflag, size = 0x4, scoped, tag = 'scoped memory for tpu_custom_call.1']
    #allocation4 [shape = 's32[1]{0}', space=sflag, size = 0x4, scoped, tag = 'scoped memory for tpu_custom_call.1']
    #allocation5 [shape = 'u8[4096]{0}', space=vmem, size = 0x1000, scoped, tag = 'output window, operand 0, single buffered']
    %6 = vsyncpa [#allocation3], 0
    %7 = vsyncpa [#allocation4], 0
    // Predicated region
    $region2: #{tpu_custom_call.1} parent=1 // pred_check
      _
    $region3: #{tpu_custom_call.1} parent=1 // pred_check_branch
      %9 = sbr.rel (0) target = $region5
    $region4: #{tpu_custom_call.1} parent=1 // pred_region
      %11 = vsyncadd [#allocation3], 0
      %s13 = sshll.u32 %s0, 4
      %s14 = int_to_ptr.hbm [resolvable:$true] %s13
      %s15 = sshll.u32 [#allocation2], 4
      %s16 = int_to_ptr.vmem [resolvable:$true] %s15
      %18 = dma.hbm_to_vmem [thread:$0]  %s14, 128, %s16, [#allocation3]
    $region5: #{tpu_custom_call.1} parent=1 // pred_fallthru
      _
    // Predicated region
    $region6: #{tpu_custom_call.1} parent=1 // pred_check
      _
    $region7: #{tpu_custom_call.1} parent=1 // pred_check_branch
      %20 = sbr.rel (0) target = $region9
    $region8: #{tpu_custom_call.1} parent=1 // pred_region
      %22 = dma.done [#allocation3], 128
    $region9: #{tpu_custom_call.1} parent=1 // pred_fallthru
      _
    %v23 = vld [vmem:[#allocation2] sm:$0xff]
    %v24 = vmul.f32 %v23, %v23
    %25 = vadd.xlane.f32.xlu0 %v24
    %v26 = vpop.xlane.xlu0 %25
    %v27 = vmax.f32 %v26, 1e-24
    %v28 = vrsqrt.pop %v27
    %v29 = vmul.f32 %v28, %v27
    %v30 = vmul.f32 %v29, %v28
    %v31 = vmul.f32 0.5, %v30
    %v32 = vsub.f32 1.5, %v31
    %v33 = vmul.f32 %v28, %v32
    %vm34 = vweird.f32 %v27
    %vm35 = vweird.f32 %v28
    %vm36 = vmor %vm34, %vm35
    %v37 = vsel %vm36, %v28, %v33
    %v38 = vmul.f32 %v23, %v37
    %39 = vst [vmem:[#allocation5] sm:$0xff] %v38
    // Predicated region
    $region10: #{tpu_custom_call.1} parent=1 // pred_check
      _
    $region11: #{tpu_custom_call.1} parent=1 // pred_check_branch
      %41 = sbr.rel (0) target = $region13
    $region12: #{tpu_custom_call.1} parent=1 // pred_region
      %43 = vsyncadd [#allocation4], 0
      %s45 = sshll.u32 [#allocation5], 4
      %s46 = int_to_ptr.vmem [resolvable:$true] %s45
      %s47 = sshll.u32 %s1, 4
      %s48 = int_to_ptr.hbm [resolvable:$true] %s47
      %50 = dma.vmem_to_hbm [thread:$0]  %s46, 128, %s48, [#allocation4]
    $region13: #{tpu_custom_call.1} parent=1 // pred_fallthru
      _
    // Predicated region
    $region14: #{tpu_custom_call.1} parent=1 // pred_check
      _
    $region15: #{tpu_custom_call.1} parent=1 // pred_check_branch
      %52 = sbr.rel (0) target = $region17
    $region16: #{tpu_custom_call.1} parent=1 // pred_region
      %54 = dma.done [#allocation4], 128
    $region17: #{tpu_custom_call.1} parent=1 // pred_fallthru
      _
    %55 = vsyncpa [#allocation3], 1
    %56 = vsyncpa [#allocation4], 1

</llo_original>
